<compile_context>
chip_gen: v7x
topology: tpu7x:2x2x1
jax: 0.10.0
libtpu: 0.0.40
codegen_flags: <defaults>
</compile_context>

<pallas_src>
import jax
import jax.numpy as jnp
import numpy as np
from jax.experimental import pallas as pl
from jax.experimental.pallas import tpu as pltpu


def conformer_conv_kernel(lens_ref, x_ref, xh_ref, w1_ref, wd_ref, w2_ref,
                          vec_ref, o_ref):
    b = pl.program_id(0)
    t = pl.program_id(1)

    x = x_ref[0]                         # (tT, D)  current tile
    xh = xh_ref[0]                       # (pad, D) tail of previous tile
    tT, D = x.shape
    pad = xh.shape[0]
    wd = wd_ref[...]                     # (K, D), BatchNorm scale pre-folded
    K = wd.shape[0]

    # --- keep masks from scalar-prefetched lengths (no mask DMA stream) -----
    seq_len = lens_ref[b]
    t0 = t * tT
    pos_main = jax.lax.broadcasted_iota(jnp.int32, (tT, 1), 0) + t0
    keep_main = (pos_main < seq_len).astype(jnp.float32)
    pos_halo = jax.lax.broadcasted_iota(jnp.int32, (pad, 1), 0) + (t0 - pad)
    # pos_halo < 0 also covers the causal zero left-padding at t == 0 (the
    # clamped halo block then holds garbage rows which are zeroed here).
    keep_halo = jnp.where((pos_halo >= 0) & (pos_halo < seq_len),
                          jnp.float32(1.0), jnp.float32(0.0))

    w1 = w1_ref[...]                     # (D, 2D) bf16: value | gate fused
    b_val = vec_ref[0:1, :]
    b_gate = vec_ref[1:2, :]
    dw_shift = vec_ref[2:3, :]           # depthwise bias + BN shift, folded
    b_out = vec_ref[3:4, :]

    # --- pointwise_conv1 + GLU + pad-mask (bf16 MXU, f32 accumulate) --------
    def glu(xv, keep):
        ab = jnp.dot(xv.astype(jnp.bfloat16), w1,
                     preferred_element_type=jnp.float32)       # (rows, 2D)
        a = ab[:, :D] + b_val
        g = ab[:, D:] + b_gate
        return a * jax.nn.sigmoid(g) * keep                    # masked_fill

    h = glu(x, keep_main)                # (tT, D)
    h_halo = glu(xh, keep_halo)          # (pad, D) recomputed halo (tiny)

    # --- causal depthwise conv: static shifted slices of [halo | tile] ------
    comb = jnp.concatenate([h_halo, h], axis=0)                # (pad+tT, D)
    off0 = pad - (K - 1)
    acc = comb[off0:off0 + tT, :] * wd[0:1, :]                 # tap 0 inits acc
    for k in range(1, K):                                      # K static -> unrolled
        acc = acc + comb[off0 + k:off0 + k + tT, :] * wd[k:k + 1, :]

    # --- depthwise bias + inference BatchNorm folded into one shift, SiLU ---
    # TODO(synk): training-mode BatchNorm (batch stats + running-stat updates)
    #             is stateful and not implemented here.
    # TODO(synk): streaming mode would seed the halo from state.conv instead
    #             of recomputing it from the previous tile of x.
    y = acc + dw_shift
    y = y * jax.nn.sigmoid(y)

    # --- pointwise_conv2 (bf16 MXU, f32 accumulate) --------------------------
    out = jnp.dot(y.astype(jnp.bfloat16), w2_ref[...],
                  preferred_element_type=jnp.float32) + b_out
    o_ref[0] = out.astype(o_ref.dtype)


def fold_params(wa, ba, wb, bb, wd, bd, gamma, beta, mean, var, eps, w2, b2):
    """Fuse the GLU matmuls, fold inference BN into the depthwise conv, and
    store the MXU weights in bf16 (f32 accumulation in-kernel)."""
    D = wa.shape[0]
    bn_scale = gamma / jnp.sqrt(var + eps)                     # (1, D)
    bn_shift = beta - mean * bn_scale                          # (1, D)
    w1 = jnp.concatenate([wa, wb], axis=1).astype(jnp.bfloat16)  # (D, 2D)
    wd_f = (wd * bn_scale).astype(jnp.float32)                 # (K, D)
    dw_shift = bd * bn_scale + bn_shift                        # (1, D)
    vecs = jnp.concatenate(
        [ba, bb, dw_shift, b2, jnp.zeros((4, D), jnp.float32)],
        axis=0).astype(jnp.float32)                            # (8, D) slab
    return w1, wd_f, w2.astype(jnp.bfloat16), vecs


def _vmem_cap_bytes():
    """Generation-aware VMEM cap: ~100 MiB on 128-MiB parts (v5e/v6e),
    <=48 MiB on 64-MiB parts (v7x)."""
    phys = 64 << 20
    try:
        info = pltpu.get_tpu_info()
        phys = int(getattr(info, "vmem_capacity_bytes", phys))
    except Exception:
        pass
    return (100 << 20) if phys >= (128 << 20) else (48 << 20)


def conformer_convolution(x, lengths, w1, wd_f, w2, vecs, *, block_t=None):
    """x: (B, T, D) f32; lengths: (B,) int32 valid-sequence lengths."""
    B, T, D = x.shape
    K = wd_f.shape[0]
    halo = K - 1
    halo_pad = max(8, ((halo + 7) // 8) * 8)    # sublane-aligned halo block

    if block_t is None:
        block_t = min(T, 512)                   # bigger tiles amortize grid
    assert T % block_t == 0, "T must be divisible by the T tile"
    assert block_t % halo_pad == 0 and block_t >= halo_pad
    assert D % 128 == 0, "pad d_model to a multiple of 128 (lane width)"
    n_t = T // block_t
    r = block_t // halo_pad                     # halo blocks per main tile

    # VMEM budget: double-buffered x/halo/out tiles + single-buffered weights
    # + generous allowance for in-register/spilled intermediates.
    wt_bytes = 2 * D * (2 * D) + 2 * D * D + 4 * K * D + 4 * 8 * D
    io_bytes = 4 * (2 * 2 * block_t * D + 2 * halo_pad * D)
    tmp_bytes = 4 * (6 * block_t * D + 2 * block_t * 2 * D)
    need = wt_bytes + io_bytes + tmp_bytes
    vmem_limit = int(min(_vmem_cap_bytes(), max(32 << 20, 2 * need)))

    flops = B * n_t * (2 * (block_t + halo_pad) * D * (2 * D)   # conv1 (+halo)
                       + 2 * block_t * D * D                    # conv2
                       + block_t * D * (2 * K + 10))            # dw + eltwise
    cost = pl.CostEstimate(
        flops=int(flops),
        transcendentals=int(B * n_t * ((block_t + halo_pad) * D + block_t * D)),
        bytes_accessed=int(4 * (2 * B * T * D + B * n_t * halo_pad * D
                                + K * D + 8 * D + B)
                           + 2 * (2 * D * D + D * D)))

    grid_spec = pltpu.PrefetchScalarGridSpec(
        num_scalar_prefetch=1,                   # lengths -> SMEM
        grid=(B, n_t),
        in_specs=[
            # current tile of x
            pl.BlockSpec((1, block_t, D), lambda b, t, lens: (b, t, 0)),
            # halo: tail of the previous tile (clamped at t==0, masked in-kernel)
            pl.BlockSpec((1, halo_pad, D),
                         lambda b, t, lens: (b, jnp.maximum(t * r - 1, 0), 0)),
            # grid-invariant operands: single-buffered
            pl.BlockSpec((D, 2 * D), lambda b, t, lens: (0, 0),
                         pipeline_mode=pl.Buffered(1)),          # w1 (bf16)
            pl.BlockSpec((K, D), lambda b, t, lens: (0, 0),
                         pipeline_mode=pl.Buffered(1)),          # wd (BN-folded)
            pl.BlockSpec((D, D), lambda b, t, lens: (0, 0),
                         pipeline_mode=pl.Buffered(1)),          # w2 (bf16)
            pl.BlockSpec((8, D), lambda b, t, lens: (0, 0),
                         pipeline_mode=pl.Buffered(1)),          # bias slab
        ],
        out_specs=pl.BlockSpec((1, block_t, D), lambda b, t, lens: (b, t, 0)),
    )

    return pl.pallas_call(
        conformer_conv_kernel,
        out_shape=jax.ShapeDtypeStruct((B, T, D), x.dtype),
        grid_spec=grid_spec,
        compiler_params=pltpu.CompilerParams(
            # No sequential carry anymore -> both axes parallel (v7x 2 TCs).
            dimension_semantics=("parallel", "parallel"),
            vmem_limit_bytes=vmem_limit),
        cost_estimate=cost,
    )(lengths, x, x, w1, wd_f, w2, vecs)


def reference_forward(x, keep_mask, raw):
    """Pure-JAX f32 reference mirroring the PyTorch forward (inference BN)."""
    wa, ba, wb, bb, wd, bd, gamma, beta, mean, var, eps, w2, b2 = raw
    B, T, D = x.shape
    K = wd.shape[0]
    a = x @ wa + ba
    g = x @ wb + bb
    h = a * jax.nn.sigmoid(g) * keep_mask
    padded = jnp.pad(h, ((0, 0), (K - 1, 0), (0, 0)))
    acc = jnp.zeros_like(h)
    for k in range(K):
        acc = acc + padded[:, k:k + T, :] * wd[k][None, None, :]
    y = acc + bd
    y = (y - mean) * (gamma / jnp.sqrt(var + eps)) + beta
    y = y * jax.nn.sigmoid(y)
    return y @ w2 + b2


if __name__ == "__main__":
    B, T, D, K = 2, 64, 128, 9        # kernel_size=9 -> (K-1) % 2 == 0
    eps = 1e-5
    key = jax.random.PRNGKey(0)
    keys = jax.random.split(key, 13)

    x = jax.random.normal(keys[0], (B, T, D), dtype=jnp.float32)

    # PyTorch parameter shapes, pre-transposed to (D_in, D_out) / (K, D):
    #   pointwise_conv1.weight (2D, D, 1) -> wa (value) / wb (gate)
    wa = jax.random.normal(keys[1], (D, D), dtype=jnp.float32) * 0.05
    wb = jax.random.normal(keys[2], (D, D), dtype=jnp.float32) * 0.05
    ba = jax.random.normal(keys[3], (1, D), dtype=jnp.float32) * 0.05
    bb = jax.random.normal(keys[4], (1, D), dtype=jnp.float32) * 0.05
    #   depthwise_conv.weight (D, 1, K) -> (K, D); bias (D,)
    wd = jax.random.normal(keys[5], (K, D), dtype=jnp.float32) * 0.1
    bd = jax.random.normal(keys[6], (1, D), dtype=jnp.float32) * 0.05
    #   BatchNorm1d(D) running stats (inference semantics)
    gamma = 1.0 + 0.1 * jax.random.normal(keys[7], (1, D), dtype=jnp.float32)
    beta = 0.05 * jax.random.normal(keys[8], (1, D), dtype=jnp.float32)
    mean = 0.1 * jax.random.normal(keys[9], (1, D), dtype=jnp.float32)
    var = jax.random.uniform(keys[10], (1, D), dtype=jnp.float32,
                             minval=0.5, maxval=1.5)
    #   pointwise_conv2.weight (D, D, 1) -> (D, D); bias (D,)
    w2 = jax.random.normal(keys[11], (D, D), dtype=jnp.float32) * 0.05
    b2 = jax.random.normal(keys[12], (1, D), dtype=jnp.float32) * 0.05

    raw = (wa, ba, wb, bb, wd, bd, gamma, beta, mean, var, eps, w2, b2)
    w1, wd_f, w2_f, vecs = fold_params(*raw)

    # pad_mask semantics: True positions in state.pad_mask are zeroed.  The
    # kernel takes per-batch valid lengths (scalar prefetch) and builds the
    # complementary keep-mask in-kernel.
    lengths = jnp.array([T, T - 12], dtype=jnp.int32)

    # block_t=32 with T=64 -> two T tiles per batch: exercises the recomputed
    # halo (tile 1) and the causal zero padding (tile 0).
    out = conformer_convolution(x, lengths, w1, wd_f, w2_f, vecs, block_t=32)
    out = jax.block_until_ready(out)

    keep_mask = (jnp.arange(T)[None, :] < lengths[:, None]).astype(jnp.float32)
    ref = reference_forward(x, keep_mask[:, :, None], raw)
    # bf16 MXU operands vs pure-f32 reference -> loosened tolerance
    # (outputs are O(0.03); observed error is O(1e-3)).
    np.testing.assert_allclose(np.asarray(out), np.asarray(ref),
                               rtol=5e-2, atol=1e-2)
    print("KERNEL_OK")
</pallas_src>

<mosaic_0001>
module attributes {stable_mosaic.version = 11 : i64} {
  func.func @conformer_conv_kernel(%arg0: i32, %arg1: i32, %arg2: memref<2xi32, #tpu.memory_space<smem>>, %arg3: memref<1x32x128xf32, #tpu.memory_space<vmem>>, %arg4: memref<1x8x128xf32, #tpu.memory_space<vmem>>, %arg5: memref<128x256xbf16, #tpu.memory_space<vmem>>, %arg6: memref<9x128xf32, #tpu.memory_space<vmem>>, %arg7: memref<128x128xbf16, #tpu.memory_space<vmem>>, %arg8: memref<8x128xf32, #tpu.memory_space<vmem>>, %arg9: memref<1x32x128xf32, #tpu.memory_space<vmem>>) attributes {dimension_semantics = [#tpu.dimension_semantics<parallel>, #tpu.dimension_semantics<parallel>], iteration_bounds = array<i64: 2, 2>, scalar_prefetch = 1 : i64, scratch_operands = 0 : i64, tpu.core_type = #tpu.core_type<tc>, window_params = [{transform_indices = @transform_0, window_bounds = array<i64: 1, 32, 128>}, {transform_indices = @transform_1, window_bounds = array<i64: 1, 8, 128>}, {pipeline_mode = #tpu.pipeline_mode<synchronous>, transform_indices = @transform_2, window_bounds = array<i64: 128, 256>}, {pipeline_mode = #tpu.pipeline_mode<synchronous>, transform_indices = @transform_3, window_bounds = array<i64: 9, 128>}, {pipeline_mode = #tpu.pipeline_mode<synchronous>, transform_indices = @transform_4, window_bounds = array<i64: 128, 128>}, {pipeline_mode = #tpu.pipeline_mode<synchronous>, transform_indices = @transform_5, window_bounds = array<i64: 8, 128>}, {transform_indices = @transform_6, window_bounds = array<i64: 1, 32, 128>}]} {
    %c0 = arith.constant 0 : index
    %c0_0 = arith.constant 0 : index
    %c0_1 = arith.constant 0 : index
    %0 = vector.load %arg3[%c0, %c0_0, %c0_1] : memref<1x32x128xf32, #tpu.memory_space<vmem>>, vector<1x32x128xf32>
    %1 = vector.shape_cast %0 : vector<1x32x128xf32> to vector<32x128xf32>
    %c0_2 = arith.constant 0 : index
    %c0_3 = arith.constant 0 : index
    %c0_4 = arith.constant 0 : index
    %2 = vector.load %arg4[%c0_2, %c0_3, %c0_4] : memref<1x8x128xf32, #tpu.memory_space<vmem>>, vector<1x8x128xf32>
    %3 = vector.shape_cast %2 : vector<1x8x128xf32> to vector<8x128xf32>
    %c0_5 = arith.constant 0 : index
    %c0_6 = arith.constant 0 : index
    %4 = vector.load %arg6[%c0_5, %c0_6] : memref<9x128xf32, #tpu.memory_space<vmem>>, vector<9x128xf32>
    %5 = arith.index_cast %arg0 : i32 to index
    %6 = memref.load %arg2[%5] : memref<2xi32, #tpu.memory_space<smem>>
    %c32_i32 = arith.constant 32 : i32
    %7 = arith.muli %arg1, %c32_i32 : i32
    %8 = tpu.iota {dimensions = array<i32: 0>} : vector<32x1xi32>
    %9 = vector.broadcast %7 : i32 to vector<32x1xi32>
    %10 = arith.addi %8, %9 : vector<32x1xi32>
    %11 = vector.broadcast %6 : i32 to vector<32x1xi32>
    %12 = arith.cmpi slt, %10, %11 : vector<32x1xi32>
    %13 = arith.extui %12 : vector<32x1xi1> to vector<32x1xi32>
    %14 = arith.sitofp %13 : vector<32x1xi32> to vector<32x1xf32>
    %15 = tpu.iota {dimensions = array<i32: 0>} : vector<8x1xi32>
    %c8_i32 = arith.constant 8 : i32
    %16 = arith.subi %7, %c8_i32 : i32
    %17 = vector.broadcast %16 : i32 to vector<8x1xi32>
    %18 = arith.addi %15, %17 : vector<8x1xi32>
    %c0_i32 = arith.constant 0 : i32
    %19 = vector.broadcast %c0_i32 : i32 to vector<8x1xi32>
    %20 = arith.cmpi sge, %18, %19 : vector<8x1xi32>
    %21 = vector.broadcast %6 : i32 to vector<8x1xi32>
    %22 = arith.cmpi slt, %18, %21 : vector<8x1xi32>
    %23 = arith.andi %20, %22 : vector<8x1xi1>
    %cst = arith.constant 1.000000e+00 : f32
    %cst_7 = arith.constant 0.000000e+00 : f32
    %24 = vector.broadcast %cst : f32 to vector<8x1xf32>
    %25 = vector.broadcast %cst_7 : f32 to vector<8x1xf32>
    %26 = arith.select %23, %24, %25 : vector<8x1xi1>, vector<8x1xf32>
    %c0_8 = arith.constant 0 : index
    %c0_9 = arith.constant 0 : index
    %27 = vector.load %arg5[%c0_8, %c0_9] : memref<128x256xbf16, #tpu.memory_space<vmem>>, vector<128x256xbf16>
    %c0_10 = arith.constant 0 : index
    %c0_11 = arith.constant 0 : index
    %28 = vector.load %arg8[%c0_10, %c0_11] : memref<8x128xf32, #tpu.memory_space<vmem>>, vector<1x128xf32>
    %c1 = arith.constant 1 : index
    %c0_12 = arith.constant 0 : index
    %29 = vector.load %arg8[%c1, %c0_12] : memref<8x128xf32, #tpu.memory_space<vmem>>, vector<1x128xf32>
    %c2 = arith.constant 2 : index
    %c0_13 = arith.constant 0 : index
    %30 = vector.load %arg8[%c2, %c0_13] : memref<8x128xf32, #tpu.memory_space<vmem>>, vector<1x128xf32>
    %c3 = arith.constant 3 : index
    %c0_14 = arith.constant 0 : index
    %31 = vector.load %arg8[%c3, %c0_14] : memref<8x128xf32, #tpu.memory_space<vmem>>, vector<1x128xf32>
    %32 = arith.truncf %1 : vector<32x128xf32> to vector<32x128xbf16>
    %cst_15 = arith.constant dense<0.000000e+00> : vector<32x256xf32>
    %33 = tpu.matmul %32, %27, %cst_15 {dimension_numbers = #tpu.dot_dimension_numbers<[1], [0], [0], [1], [0, 0, 1, 1], [], []>} : vector<32x128xbf16>, vector<128x256xbf16>, vector<32x256xf32> -> vector<32x256xf32>
    %34 = vector.extract_strided_slice %33 {offsets = [0, 0], sizes = [32, 128], strides = [1, 1]} : vector<32x256xf32> to vector<32x128xf32>
    %35 = vector.broadcast %28 : vector<1x128xf32> to vector<32x128xf32>
    %36 = arith.addf %34, %35 : vector<32x128xf32>
    %37 = vector.extract_strided_slice %33 {offsets = [0, 128], sizes = [32, 128], strides = [1, 1]} : vector<32x256xf32> to vector<32x128xf32>
    %38 = vector.broadcast %29 : vector<1x128xf32> to vector<32x128xf32>
    %39 = arith.addf %37, %38 : vector<32x128xf32>
    %40 = arith.negf %39 : vector<32x128xf32>
    %41 = math.exp %40 : vector<32x128xf32>
    %cst_16 = arith.constant 1.000000e+00 : f32
    %42 = vector.broadcast %cst_16 : f32 to vector<32x128xf32>
    %43 = arith.addf %42, %41 : vector<32x128xf32>
    %44 = arith.divf %42, %43 : vector<32x128xf32>
    %45 = arith.mulf %36, %44 : vector<32x128xf32>
    %46 = vector.broadcast %14 : vector<32x1xf32> to vector<32x128xf32>
    %47 = arith.mulf %45, %46 : vector<32x128xf32>
    %48 = arith.truncf %3 : vector<8x128xf32> to vector<8x128xbf16>
    %cst_17 = arith.constant dense<0.000000e+00> : vector<8x256xf32>
    %49 = tpu.matmul %48, %27, %cst_17 {dimension_numbers = #tpu.dot_dimension_numbers<[1], [0], [0], [1], [0, 0, 1, 1], [], []>} : vector<8x128xbf16>, vector<128x256xbf16>, vector<8x256xf32> -> vector<8x256xf32>
    %50 = vector.extract_strided_slice %49 {offsets = [0, 0], sizes = [8, 128], strides = [1, 1]} : vector<8x256xf32> to vector<8x128xf32>
    %51 = vector.broadcast %28 : vector<1x128xf32> to vector<8x128xf32>
    %52 = arith.addf %50, %51 : vector<8x128xf32>
    %53 = vector.extract_strided_slice %49 {offsets = [0, 128], sizes = [8, 128], strides = [1, 1]} : vector<8x256xf32> to vector<8x128xf32>
    %54 = vector.broadcast %29 : vector<1x128xf32> to vector<8x128xf32>
    %55 = arith.addf %53, %54 : vector<8x128xf32>
    %56 = arith.negf %55 : vector<8x128xf32>
    %57 = math.exp %56 : vector<8x128xf32>
    %cst_18 = arith.constant 1.000000e+00 : f32
    %58 = vector.broadcast %cst_18 : f32 to vector<8x128xf32>
    %59 = arith.addf %58, %57 : vector<8x128xf32>
    %60 = arith.divf %58, %59 : vector<8x128xf32>
    %61 = arith.mulf %52, %60 : vector<8x128xf32>
    %62 = vector.broadcast %26 : vector<8x1xf32> to vector<8x128xf32>
    %63 = arith.mulf %61, %62 : vector<8x128xf32>
    %64 = tpu.concatenate %63, %47 in 0 : vector<8x128xf32>, vector<32x128xf32> -> vector<40x128xf32>
    %65 = vector.extract_strided_slice %64 {offsets = [0, 0], sizes = [32, 128], strides = [1, 1]} : vector<40x128xf32> to vector<32x128xf32>
    %66 = vector.extract_strided_slice %4 {offsets = [0, 0], sizes = [1, 128], strides = [1, 1]} : vector<9x128xf32> to vector<1x128xf32>
    %67 = vector.broadcast %66 : vector<1x128xf32> to vector<32x128xf32>
    %68 = arith.mulf %65, %67 : vector<32x128xf32>
    %69 = vector.extract_strided_slice %64 {offsets = [1, 0], sizes = [32, 128], strides = [1, 1]} : vector<40x128xf32> to vector<32x128xf32>
    %70 = vector.extract_strided_slice %4 {offsets = [1, 0], sizes = [1, 128], strides = [1, 1]} : vector<9x128xf32> to vector<1x128xf32>
    %71 = vector.broadcast %70 : vector<1x128xf32> to vector<32x128xf32>
    %72 = arith.mulf %69, %71 : vector<32x128xf32>
    %73 = arith.addf %68, %72 : vector<32x128xf32>
    %74 = vector.extract_strided_slice %64 {offsets = [2, 0], sizes = [32, 128], strides = [1, 1]} : vector<40x128xf32> to vector<32x128xf32>
    %75 = vector.extract_strided_slice %4 {offsets = [2, 0], sizes = [1, 128], strides = [1, 1]} : vector<9x128xf32> to vector<1x128xf32>
    %76 = vector.broadcast %75 : vector<1x128xf32> to vector<32x128xf32>
    %77 = arith.mulf %74, %76 : vector<32x128xf32>
    %78 = arith.addf %73, %77 : vector<32x128xf32>
    %79 = vector.extract_strided_slice %64 {offsets = [3, 0], sizes = [32, 128], strides = [1, 1]} : vector<40x128xf32> to vector<32x128xf32>
    %80 = vector.extract_strided_slice %4 {offsets = [3, 0], sizes = [1, 128], strides = [1, 1]} : vector<9x128xf32> to vector<1x128xf32>
    %81 = vector.broadcast %80 : vector<1x128xf32> to vector<32x128xf32>
    %82 = arith.mulf %79, %81 : vector<32x128xf32>
    %83 = arith.addf %78, %82 : vector<32x128xf32>
    %84 = vector.extract_strided_slice %64 {offsets = [4, 0], sizes = [32, 128], strides = [1, 1]} : vector<40x128xf32> to vector<32x128xf32>
    %85 = vector.extract_strided_slice %4 {offsets = [4, 0], sizes = [1, 128], strides = [1, 1]} : vector<9x128xf32> to vector<1x128xf32>
    %86 = vector.broadcast %85 : vector<1x128xf32> to vector<32x128xf32>
    %87 = arith.mulf %84, %86 : vector<32x128xf32>
    %88 = arith.addf %83, %87 : vector<32x128xf32>
    %89 = vector.extract_strided_slice %64 {offsets = [5, 0], sizes = [32, 128], strides = [1, 1]} : vector<40x128xf32> to vector<32x128xf32>
    %90 = vector.extract_strided_slice %4 {offsets = [5, 0], sizes = [1, 128], strides = [1, 1]} : vector<9x128xf32> to vector<1x128xf32>
    %91 = vector.broadcast %90 : vector<1x128xf32> to vector<32x128xf32>
    %92 = arith.mulf %89, %91 : vector<32x128xf32>
    %93 = arith.addf %88, %92 : vector<32x128xf32>
    %94 = vector.extract_strided_slice %64 {offsets = [6, 0], sizes = [32, 128], strides = [1, 1]} : vector<40x128xf32> to vector<32x128xf32>
    %95 = vector.extract_strided_slice %4 {offsets = [6, 0], sizes = [1, 128], strides = [1, 1]} : vector<9x128xf32> to vector<1x128xf32>
    %96 = vector.broadcast %95 : vector<1x128xf32> to vector<32x128xf32>
    %97 = arith.mulf %94, %96 : vector<32x128xf32>
    %98 = arith.addf %93, %97 : vector<32x128xf32>
    %99 = vector.extract_strided_slice %64 {offsets = [7, 0], sizes = [32, 128], strides = [1, 1]} : vector<40x128xf32> to vector<32x128xf32>
    %100 = vector.extract_strided_slice %4 {offsets = [7, 0], sizes = [1, 128], strides = [1, 1]} : vector<9x128xf32> to vector<1x128xf32>
    %101 = vector.broadcast %100 : vector<1x128xf32> to vector<32x128xf32>
    %102 = arith.mulf %99, %101 : vector<32x128xf32>
    %103 = arith.addf %98, %102 : vector<32x128xf32>
    %104 = vector.extract_strided_slice %64 {offsets = [8, 0], sizes = [32, 128], strides = [1, 1]} : vector<40x128xf32> to vector<32x128xf32>
    %105 = vector.extract_strided_slice %4 {offsets = [8, 0], sizes = [1, 128], strides = [1, 1]} : vector<9x128xf32> to vector<1x128xf32>
    %106 = vector.broadcast %105 : vector<1x128xf32> to vector<32x128xf32>
    %107 = arith.mulf %104, %106 : vector<32x128xf32>
    %108 = arith.addf %103, %107 : vector<32x128xf32>
    %109 = vector.broadcast %30 : vector<1x128xf32> to vector<32x128xf32>
    %110 = arith.addf %108, %109 : vector<32x128xf32>
    %111 = arith.negf %110 : vector<32x128xf32>
    %112 = math.exp %111 : vector<32x128xf32>
    %cst_19 = arith.constant 1.000000e+00 : f32
    %113 = vector.broadcast %cst_19 : f32 to vector<32x128xf32>
    %114 = arith.addf %113, %112 : vector<32x128xf32>
    %115 = arith.divf %113, %114 : vector<32x128xf32>
    %116 = arith.mulf %110, %115 : vector<32x128xf32>
    %117 = arith.truncf %116 : vector<32x128xf32> to vector<32x128xbf16>
    %c0_20 = arith.constant 0 : index
    %c0_21 = arith.constant 0 : index
    %118 = vector.load %arg7[%c0_20, %c0_21] : memref<128x128xbf16, #tpu.memory_space<vmem>>, vector<128x128xbf16>
    %cst_22 = arith.constant dense<0.000000e+00> : vector<32x128xf32>
    %119 = tpu.matmul %117, %118, %cst_22 {dimension_numbers = #tpu.dot_dimension_numbers<[1], [0], [0], [1], [0, 0, 1, 1], [], []>} : vector<32x128xbf16>, vector<128x128xbf16>, vector<32x128xf32> -> vector<32x128xf32>
    %120 = vector.broadcast %31 : vector<1x128xf32> to vector<32x128xf32>
    %121 = arith.addf %119, %120 : vector<32x128xf32>
    %c0_23 = arith.constant 0 : index
    %c0_24 = arith.constant 0 : index
    %c0_25 = arith.constant 0 : index
    %122 = vector.load %arg9[%c0_23, %c0_24, %c0_25] : memref<1x32x128xf32, #tpu.memory_space<vmem>>, vector<1x32x128xf32>
    %123 = vector.shape_cast %122 : vector<1x32x128xf32> to vector<32x128xf32>
    %124 = vector.shape_cast %121 : vector<32x128xf32> to vector<1x32x128xf32>
    tpu.vector_store %arg9[%c0_23, %c0_24, %c0_25], %124 {strides = array<i32>} : memref<1x32x128xf32, #tpu.memory_space<vmem>>, vector<1x32x128xf32>,
    return
  }
  func.func @transform_0(%arg0: i32, %arg1: i32, %arg2: memref<2xi32, #tpu.memory_space<smem>>) -> (i32, i32, i32) {
    %c0_i32 = arith.constant 0 : i32
    %c0_i32_0 = arith.constant 0 : i32
    return %arg0, %arg1, %c0_i32 : i32, i32, i32
  }
  func.func @transform_1(%arg0: i32, %arg1: i32, %arg2: memref<2xi32, #tpu.memory_space<smem>>) -> (i32, i32, i32) {
    %c4_i32 = arith.constant 4 : i32
    %0 = arith.muli %arg1, %c4_i32 : i32
    %c1_i32 = arith.constant 1 : i32
    %1 = arith.subi %0, %c1_i32 : i32
    %c0_i32 = arith.constant 0 : i32
    %2 = arith.maxsi %1, %c0_i32 : i32
    %c0_i32_0 = arith.constant 0 : i32
    %c0_i32_1 = arith.constant 0 : i32
    return %arg0, %2, %c0_i32_0 : i32, i32, i32
  }
  func.func @transform_2(%arg0: i32, %arg1: i32, %arg2: memref<2xi32, #tpu.memory_space<smem>>) -> (i32, i32) {
    %c0_i32 = arith.constant 0 : i32
    %c0_i32_0 = arith.constant 0 : i32
    %c0_i32_1 = arith.constant 0 : i32
    return %c0_i32, %c0_i32_0 : i32, i32
  }
  func.func @transform_3(%arg0: i32, %arg1: i32, %arg2: memref<2xi32, #tpu.memory_space<smem>>) -> (i32, i32) {
    %c0_i32 = arith.constant 0 : i32
    %c0_i32_0 = arith.constant 0 : i32
    %c0_i32_1 = arith.constant 0 : i32
    return %c0_i32, %c0_i32_0 : i32, i32
  }
  func.func @transform_4(%arg0: i32, %arg1: i32, %arg2: memref<2xi32, #tpu.memory_space<smem>>) -> (i32, i32) {
    %c0_i32 = arith.constant 0 : i32
    %c0_i32_0 = arith.constant 0 : i32
    %c0_i32_1 = arith.constant 0 : i32
    return %c0_i32, %c0_i32_0 : i32, i32
  }
  func.func @transform_5(%arg0: i32, %arg1: i32, %arg2: memref<2xi32, #tpu.memory_space<smem>>) -> (i32, i32) {
    %c0_i32 = arith.constant 0 : i32
    %c0_i32_0 = arith.constant 0 : i32
    %c0_i32_1 = arith.constant 0 : i32
    return %c0_i32, %c0_i32_0 : i32, i32
  }
  func.func @transform_6(%arg0: i32, %arg1: i32, %arg2: memref<2xi32, #tpu.memory_space<smem>>) -> (i32, i32, i32) {
    %c0_i32 = arith.constant 0 : i32
    %c0_i32_0 = arith.constant 0 : i32
    return %arg0, %arg1, %c0_i32 : i32, i32, i32
  }
}

</mosaic_0001>

<llo_original>
// kernel: tpu_custom_call.1
$region0: #{tpu_custom_call.1}
  #allocation0 [shape = 'u32[]', space=smem, size = 0x4, offset = 0x4, fixed_abs, tag = 'smem constant byte address 0x4 - core index']
  #allocation1 [shape = 'u32[144,128]{1,0:T(1,128)}', space=vmem, size = 0x12000, scoped, tag = 'internal scratch']
  #allocation2 [shape = 's32[1]{0}', space=sflag, size = 0x4, scoped, tag = 'scoped memory for tpu_custom_call.1']
  #allocation3 [shape = 'u8[512]{0}', space=smem, size = 0x200, scoped, tag = 'prefetched SMEM operand 0']
  %s0 = inlined_call_operand.hbm [shape: s32[2], index: 0, kind: input, shape index: {}]
  %s1 = inlined_call_operand.hbm [shape: f32[2,64,128], index: 1, kind: input, shape index: {}]
  %s2 = inlined_call_operand.hbm [shape: f32[2,64,128], index: 2, kind: input, shape index: {}]
  %s3 = inlined_call_operand.hbm [shape: bf16[128,256], index: 3, kind: input, shape index: {}]
  %s4 = inlined_call_operand.hbm [shape: f32[9,128], index: 4, kind: input, shape index: {}]
  %s5 = inlined_call_operand.hbm [shape: bf16[128,128], index: 5, kind: input, shape index: {}]
  %s6 = inlined_call_operand.vmem [shape: f32[8,128], index: 6, kind: input, shape index: {}]
  %s7 = inlined_call_operand.hbm [shape: f32[2,64,128], index: 7, kind: output, shape index: {}]
  %s8 = sld [smem:[#allocation0]]
  $region77: #{tpu_custom_call.1} parent=0
    _
  %s10 = ssub.s32 1, %s8
  %s11 = scalar_select 0, %s10, %s8
  %13 = dma.hbm_to_smem %s0, 16, [#allocation3], [#allocation2]
  %14 = dma.done [#allocation2], 16
  %15 = sfence
  $region1: #{tpu_custom_call.1} parent=0
    #allocation4 [shape = 'u8[32768]{0}', space=vmem, size = 0x8000, scoped, tag = 'input window, operand 1']
    #allocation5 [shape = 's32[2]{0}', space=sflag, size = 0x8, scoped, tag = 'scoped memory for tpu_custom_call.1']
    #allocation6 [shape = 's32[2]{0}', space=sflag, size = 0x8, scoped, tag = 'scoped memory for tpu_custom_call.1']
    #allocation7 [shape = 'u8[8192]{0}', space=vmem, size = 0x2000, scoped, tag = 'input window, operand 2']
    #allocation8 [shape = 's32[2]{0}', space=sflag, size = 0x8, scoped, tag = 'scoped memory for tpu_custom_call.1']
    #allocation9 [shape = 'u8[65536]{0}', space=vmem, size = 0x10000, scoped, tag = 'input window, operand 3, single buffered']
    #allocation10 [shape = 'u8[8192]{0}', space=vmem, size = 0x2000, scoped, tag = 'input window, operand 4, single buffered']
    #allocation11 [shape = 's32[1]{0}', space=sflag, size = 0x4, scoped, tag = 'scoped memory for tpu_custom_call.1']
    #allocation12 [shape = 'u8[32768]{0}', space=vmem, size = 0x8000, scoped, tag = 'input window, operand 5, single buffered']
    #allocation13 [shape = 'u8[32768]{0}', space=vmem, size = 0x8000, scoped, tag = 'output window, operand 0']
    %16 = vsyncpa [#allocation5], 0
    %s17 = scalar_lea.sflag [#allocation5], 1
    %18 = vsyncpa %s17, 0
    %19 = vsyncpa [#allocation8], 0
    %s20 = scalar_lea.sflag [#allocation8], 1
    %21 = vsyncpa %s20, 0
    %22 = vsyncpa [#allocation11], 0
    %23 = vsyncpa [#allocation6], 0
    %s24 = scalar_lea.sflag [#allocation6], 1
    %25 = vsyncpa %s24, 0
    loop: start=0, step=1, limit=6
    $region2: #{tpu_custom_call.1} parent=1 // loop_pre_header
      _
    $region3: #{tpu_custom_call.1} parent=1 // loop_header
      %s27 = sphi 0, %s31
      %p28 = scmp.ge.s32.totalorder %s27, 6
      %s34 = sphi 0, %s46
      %s35 = sphi 0, %s42
      %s36 = sphi 0, %s34
      %s37 = sphi 0, %s35
      %s38 = sphi 0, %s36
      %s39 = sphi 0, %s37
      %s51 = sphi 0, %s53
      %s54 = sphi 0, %s51
      %s55 = sphi 0, %s54
      %s71 = sphi 0, %s55
      %s87 = sphi 0, %s89
      %s90 = sphi 0, %s87
      %s91 = sphi 0, %s90
      %s107 = sphi 0, %s91
      %s111 = sphi 0, %s111
      %s113 = sphi 0, %s111
      %s114 = sphi 0, %s113
      %s128 = sphi 0, %s114
      %s132 = sphi 0, %s132
      %s134 = sphi 0, %s132
      %s135 = sphi 0, %s134
      %s149 = sphi 0, %s135
      %s153 = sphi 0, %s153
      %s155 = sphi 0, %s153
      %s156 = sphi 0, %s155
      %s170 = sphi 0, %s156
      %s174 = sphi 0, %s174
      %s176 = sphi 0, %s174
      %s177 = sphi 0, %s176
      %s191 = sphi 0, %s177
      %s199 = sphi 0, %s201
      %s202 = sphi 0, %s199
      %s203 = sphi 0, %s202
      %s219 = sphi 0, %s203
    $region4: #{tpu_custom_call.1} parent=1 // loop_header_branch
      %30 = sbr.rel (%p28) target = $region8
    $region5: #{tpu_custom_call.1} parent=1 // loop_body
      %s32 = ssub.s32 %s27, 1
      %s33 = ssub.s32 %s27, 2
      %s40 = sadd.s32 1, %s35
      %p41 = scmp.ge.s32.totalorder %s40, 2
      %s42 = scalar_select %p41, 0, %s40
      %s43 = sadd.s32 1, %s34
      %s44 = scalar_select %p41, %s43, %s34
      %p45 = scmp.ge.s32.totalorder %s44, 2
      %s46 = scalar_select %p45, 0, %s44
      %s47 = ssub.s32 %s34, %s46
      %s48 = ssub.s32 %s35, %s42
      %s49 = sor.u32 %s47, %s48
      %p50 = scmp.eq.s32.totalorder %s49, 0
      %s52 = sadd.s32 %s51, 1
      %s53 = scalar_select %p50, %s51, %s52
      %p56 = pneg %p50
      %p57 = scmp.eq.s32.totalorder %s27, 3
      %p58 = por %p56, %p57
      %p59 = scmp.ne.s32.totalorder %s51, %s54
      %p60 = scmp.eq.s32.totalorder %s27, 0
      %p61 = por %p59, %p60
      %p62 = scmp.ne.s32.totalorder %s51, %s54
      %p63 = scmp.eq.s32.totalorder %s32, 3
      %p64 = por %p62, %p63
      %p65 = scmp.ne.s32.totalorder %s54, %s55
      %p66 = scmp.eq.s32.totalorder %s32, 0
      %p67 = por %p65, %p66
      %p68 = scmp.ne.s32.totalorder %s54, %s55
      %p69 = scmp.eq.s32.totalorder %s33, 3
      %p70 = por %p68, %p69
      %p72 = scmp.ne.s32.totalorder %s55, %s71
      %p73 = scmp.eq.s32.totalorder %s33, 0
      %p74 = por %p72, %p73
      %s75 = smul.u32 %s35, 4
      %s76 = ssub.s32 %s75, 1
      %p77 = scmp.gt.s32.totalorder %s76, 0
      %s78 = scalar_select %p77, %s76, 0
      %s79 = smul.u32 %s42, 4
      %s80 = ssub.s32 %s79, 1
      %p81 = scmp.gt.s32.totalorder %s80, 0
      %s82 = scalar_select %p81, %s80, 0
      %s83 = ssub.s32 %s34, %s46
      %s84 = ssub.s32 %s78, %s82
      %s85 = sor.u32 %s83, %s84
      %p86 = scmp.eq.s32.totalorder %s85, 0
      %s88 = sadd.s32 %s87, 1
      %s89 = scalar_select %p86, %s87, %s88
      %p92 = pneg %p86
      %p93 = scmp.eq.s32.totalorder %s27, 3
      %p94 = por %p92, %p93
      %p95 = scmp.ne.s32.totalorder %s87, %s90
      %p96 = scmp.eq.s32.totalorder %s27, 0
      %p97 = por %p95, %p96
      %p98 = scmp.ne.s32.totalorder %s87, %s90
      %p99 = scmp.eq.s32.totalorder %s32, 3
      %p100 = por %p98, %p99
      %p101 = scmp.ne.s32.totalorder %s90, %s91
      %p102 = scmp.eq.s32.totalorder %s32, 0
      %p103 = por %p101, %p102
      %p104 = scmp.ne.s32.totalorder %s90, %s91
      %p105 = scmp.eq.s32.totalorder %s33, 3
      %p106 = por %p104, %p105
      %p108 = scmp.ne.s32.totalorder %s91, %s107
      %p109 = scmp.eq.s32.totalorder %s33, 0
      %p110 = por %p108, %p109
      %s112 = sadd.s32 %s111, 1
      %p115 = scmp.eq.s32.totalorder %s27, 3
      %p116 = scmp.ne.s32.totalorder %s111, %s113
      %p117 = scmp.eq.s32.totalorder %s27, 0
      %p118 = por %p116, %p117
      %p119 = scmp.ne.s32.totalorder %s111, %s113
      %p120 = scmp.eq.s32.totalorder %s32, 3
      %p121 = por %p119, %p120
      %p122 = scmp.ne.s32.totalorder %s113, %s114
      %p123 = scmp.eq.s32.totalorder %s32, 0
      %p124 = por %p122, %p123
      %p125 = scmp.ne.s32.totalorder %s113, %s114
      %p126 = scmp.eq.s32.totalorder %s33, 3
      %p127 = por %p125, %p126
      %p129 = scmp.ne.s32.totalorder %s114, %s128
      %p130 = scmp.eq.s32.totalorder %s33, 0
      %p131 = por %p129, %p130
      %s133 = sadd.s32 %s132, 1
      %p136 = scmp.eq.s32.totalorder %s27, 3
      %p137 = scmp.ne.s32.totalorder %s132, %s134
      %p138 = scmp.eq.s32.totalorder %s27, 0
      %p139 = por %p137, %p138
      %p140 = scmp.ne.s32.totalorder %s132, %s134
      %p141 = scmp.eq.s32.totalorder %s32, 3
      %p142 = por %p140, %p141
      %p143 = scmp.ne.s32.totalorder %s134, %s135
      %p144 = scmp.eq.s32.totalorder %s32, 0
      %p145 = por %p143, %p144
      %p146 = scmp.ne.s32.totalorder %s134, %s135
      %p147 = scmp.eq.s32.totalorder %s33, 3
      %p148 = por %p146, %p147
      %p150 = scmp.ne.s32.totalorder %s135, %s149
      %p151 = scmp.eq.s32.totalorder %s33, 0
      %p152 = por %p150, %p151
      %s154 = sadd.s32 %s153, 1
      %p157 = scmp.eq.s32.totalorder %s27, 3
      %p158 = scmp.ne.s32.totalorder %s153, %s155
      %p159 = scmp.eq.s32.totalorder %s27, 0
      %p160 = por %p158, %p159
      %p161 = scmp.ne.s32.totalorder %s153, %s155
      %p162 = scmp.eq.s32.totalorder %s32, 3
      %p163 = por %p161, %p162
      %p164 = scmp.ne.s32.totalorder %s155, %s156
      %p165 = scmp.eq.s32.totalorder %s32, 0
      %p166 = por %p164, %p165
      %p167 = scmp.ne.s32.totalorder %s155, %s156
      %p168 = scmp.eq.s32.totalorder %s33, 3
      %p169 = por %p167, %p168
      %p171 = scmp.ne.s32.totalorder %s156, %s170
      %p172 = scmp.eq.s32.totalorder %s33, 0
      %p173 = por %p171, %p172
      %s175 = sadd.s32 %s174, 1
      %p178 = scmp.eq.s32.totalorder %s27, 3
      %p179 = scmp.ne.s32.totalorder %s174, %s176
      %p180 = scmp.eq.s32.totalorder %s27, 0
      %p181 = por %p179, %p180
      %p182 = scmp.ne.s32.totalorder %s174, %s176
      %p183 = scmp.eq.s32.totalorder %s32, 3
      %p184 = por %p182, %p183
      %p185 = scmp.ne.s32.totalorder %s176, %s177
      %p186 = scmp.eq.s32.totalorder %s32, 0
      %p187 = por %p185, %p186
      %p188 = scmp.ne.s32.totalorder %s176, %s177
      %p189 = scmp.eq.s32.totalorder %s33, 3
      %p190 = por %p188, %p189
      %p192 = scmp.ne.s32.totalorder %s177, %s191
      %p193 = scmp.eq.s32.totalorder %s33, 0
      %p194 = por %p192, %p193
      %s195 = ssub.s32 %s34, %s46
      %s196 = ssub.s32 %s35, %s42
      %s197 = sor.u32 %s195, %s196
      %p198 = scmp.eq.s32.totalorder %s197, 0
      %s200 = sadd.s32 %s199, 1
      %s201 = scalar_select %p198, %s199, %s200
      %p204 = pneg %p198
      %p205 = scmp.eq.s32.totalorder %s27, 3
      %p206 = por %p204, %p205
      %p207 = scmp.ne.s32.totalorder %s199, %s202
      %p208 = scmp.eq.s32.totalorder %s27, 0
      %p209 = por %p207, %p208
      %p210 = scmp.ne.s32.totalorder %s199, %s202
      %p211 = scmp.eq.s32.totalorder %s32, 3
      %p212 = por %p210, %p211
      %p213 = scmp.ne.s32.totalorder %s202, %s203
      %p214 = scmp.eq.s32.totalorder %s32, 0
      %p215 = por %p213, %p214
      %p216 = scmp.ne.s32.totalorder %s202, %s203
      %p217 = scmp.eq.s32.totalorder %s33, 3
      %p218 = por %p216, %p217
      %p220 = scmp.ne.s32.totalorder %s203, %s219
      %p221 = scmp.eq.s32.totalorder %s33, 0
      %p222 = por %p220, %p221
      %p223 = scmp.le.s32.totalorder 1, %s27
      %p224 = scmp.lt.s32.totalorder %s27, 5
      %p225 = pnand %p223, %p224
      %p226 = pneg %p225
      // Predicated region
      $region9: #{tpu_custom_call.1} parent=5 // pred_check
        _
      $region10: #{tpu_custom_call.1} parent=5 // pred_check_branch
        %228 = sbr.rel (%p225) target = $region12
      $region11: #{tpu_custom_call.1} parent=5 // pred_region
        %s229 = ssub.s32 %s27, 1
        // Predicated region
        $region13: #{tpu_custom_call.1} parent=11 // pred_check
          %p230 = pneg %p124
        $region14: #{tpu_custom_call.1} parent=11 // pred_check_branch
          %232 = sbr.rel (%p230) target = $region16
        $region15: #{tpu_custom_call.1} parent=11 // pred_region
          %s234 = ssub.s32 2048, 2048
          %235 = vsyncadd [#allocation8], %s234
          %s236 = sshll.u32 [#allocation9], 4
          %s237 = int_to_ptr.vmem [resolvable:$true] %s236
          %242 = dma.hbm_to_vmem [thread:$0]  %s3, 2048, %s237, [#allocation8], 128, 128, 8
        $region16: #{tpu_custom_call.1} parent=11 // pred_fallthru
          _
        // Predicated region
        $region17: #{tpu_custom_call.1} parent=11 // pred_check
          %p243 = pneg %p145
        $region18: #{tpu_custom_call.1} parent=11 // pred_check_branch
          %245 = sbr.rel (%p243) target = $region20
        $region19: #{tpu_custom_call.1} parent=11 // pred_region
          %s247 = ssub.s32 256, 256
          %248 = vsyncadd [#allocation11], %s247
          %s249 = sshll.u32 [#allocation10], 4
          %s250 = int_to_ptr.vmem [resolvable:$true] %s249
          %255 = dma.hbm_to_vmem [thread:$0]  %s4, 256, %s250, [#allocation11], 128, 128, 8
        $region20: #{tpu_custom_call.1} parent=11 // pred_fallthru
          _
        // Predicated region
        $region21: #{tpu_custom_call.1} parent=11 // pred_check
          %p256 = pneg %p166
        $region22: #{tpu_custom_call.1} parent=11 // pred_check_branch
          %258 = sbr.rel (%p256) target = $region24
        $region23: #{tpu_custom_call.1} parent=11 // pred_region
          %s260 = ssub.s32 1024, 1024
          %261 = vsyncadd [#allocation11], %s260
          %s262 = sshll.u32 [#allocation12], 4
          %s263 = int_to_ptr.vmem [resolvable:$true] %s262
          %268 = dma.hbm_to_vmem [thread:$0]  %s5, 1024, %s263, [#allocation11], 64, 64, 4
        $region24: #{tpu_custom_call.1} parent=11 // pred_fallthru
          _
        // Predicated region
        $region25: #{tpu_custom_call.1} parent=11 // pred_check
          %p269 = pneg %p187
        $region26: #{tpu_custom_call.1} parent=11 // pred_check_branch
          %271 = sbr.rel (%p269) target = $region28
        $region27: #{tpu_custom_call.1} parent=11 // pred_region
          _
        $region28: #{tpu_custom_call.1} parent=11 // pred_fallthru
          _
      $region12: #{tpu_custom_call.1} parent=5 // pred_fallthru
        _
      %p272 = scmp.lt.s32.totalorder %s27, 4
      // Predicated region
      $region29: #{tpu_custom_call.1} parent=5 // pred_check
        %p273 = pneg %p272
      $region30: #{tpu_custom_call.1} parent=5 // pred_check_branch
        %275 = sbr.rel (%p273) target = $region32
      $region31: #{tpu_custom_call.1} parent=5 // pred_region
        // Predicated region
        $region33: #{tpu_custom_call.1} parent=31 // pred_check
          %p276 = pneg %p61
        $region34: #{tpu_custom_call.1} parent=31 // pred_check_branch
          %278 = sbr.rel (%p276) target = $region36
        $region35: #{tpu_custom_call.1} parent=31 // pred_region
          %s279 = sand.u32 %s51, 1
          %s280 = scalar_lea.sflag [#allocation5], %s279
          %s281 = sand.u32 %s51, 1
          %s282 = smul.addr %s281, 32
          %s283 = scalar_lea.vmem [#allocation4], %s282
          %s284 = smul.u32 4, %s35
          %s286 = ssub.s32 512, 512
          %287 = vsyncadd %s280, %s286
          %s288 = smul.addr %s34, 8
          %s289 = sadd.s32 %s284, %s288
          %s290 = smul.addr %s289, 128
          %s291 = scalar_lea.hbm %s1, %s290
          %s292 = sshll.u32 %s283, 4
          %s293 = int_to_ptr.vmem [resolvable:$true] %s292
          %298 = dma.hbm_to_vmem [thread:$0]  %s291, 512, %s293, %s280, 128, 128, 8
        $region36: #{tpu_custom_call.1} parent=31 // pred_fallthru
          _
        // Predicated region
        $region37: #{tpu_custom_call.1} parent=31 // pred_check
          %p299 = pneg %p97
        $region38: #{tpu_custom_call.1} parent=31 // pred_check_branch
          %301 = sbr.rel (%p299) target = $region40
        $region39: #{tpu_custom_call.1} parent=31 // pred_region
          %s302 = sand.u32 %s27, 1
          %s303 = scalar_lea.sflag [#allocation8], %s302
          %s304 = sand.u32 %s87, 1
          %s305 = smul.addr %s304, 8
          %s306 = scalar_lea.vmem [#allocation7], %s305
          %s307 = smul.u32 %s35, 4
          %s308 = ssub.s32 %s307, 1
          %p309 = scmp.gt.s32.totalorder %s308, 0
          %s310 = scalar_select %p309, %s308, 0
          %s312 = ssub.s32 128, 128
          %313 = vsyncadd %s303, %s312
          %s314 = smul.addr %s34, 8
          %s315 = sadd.s32 %s310, %s314
          %s316 = smul.addr %s315, 128
          %s317 = scalar_lea.hbm %s2, %s316
          %s319 = sshll.u32 %s306, 4
          %s320 = int_to_ptr.vmem [resolvable:$true] %s319
          %322 = dma.hbm_to_vmem [thread:$0]  %s317, 128, %s320, %s303
        $region40: #{tpu_custom_call.1} parent=31 // pred_fallthru
          _
      $region32: #{tpu_custom_call.1} parent=5 // pred_fallthru
        _
      %p323 = scmp.le.s32.totalorder 1, %s27
      %p324 = scmp.lt.s32.totalorder %s27, 5
      %p325 = pnand %p323, %p324
      %p326 = pneg %p325
      // Predicated region
      $region41: #{tpu_custom_call.1} parent=5 // pred_check
        _
      $region42: #{tpu_custom_call.1} parent=5 // pred_check_branch
        %328 = sbr.rel (%p325) target = $region44
      $region43: #{tpu_custom_call.1} parent=5 // pred_region
        %s329 = ssub.s32 %s27, 1
        %s330 = sand.u32 %s54, 1
        %s331 = scalar_lea.sflag [#allocation5], %s330
        %s332 = sand.u32 %s54, 1
        %s333 = smul.addr %s332, 32
        %s334 = scalar_lea.vmem [#allocation4], %s333
        // Predicated region
        $region45: #{tpu_custom_call.1} parent=43 // pred_check
          %p335 = pneg %p67
        $region46: #{tpu_custom_call.1} parent=43 // pred_check_branch
          %337 = sbr.rel (%p335) target = $region48
        $region47: #{tpu_custom_call.1} parent=43 // pred_region
          %338 = dma.done %s331, 512
        $region48: #{tpu_custom_call.1} parent=43 // pred_fallthru
          _
        %s339 = sand.u32 %s32, 1
        %s340 = scalar_lea.sflag [#allocation8], %s339
        %s341 = sand.u32 %s90, 1
        %s342 = smul.addr %s341, 8
        %s343 = scalar_lea.vmem [#allocation7], %s342
        // Predicated region
        $region49: #{tpu_custom_call.1} parent=43 // pred_check
          %p344 = pneg %p103
        $region50: #{tpu_custom_call.1} parent=43 // pred_check_branch
          %346 = sbr.rel (%p344) target = $region52
        $region51: #{tpu_custom_call.1} parent=43 // pred_region
          %347 = dma.done %s340, 128
        $region52: #{tpu_custom_call.1} parent=43 // pred_fallthru
          _
        // Predicated region
        $region53: #{tpu_custom_call.1} parent=43 // pred_check
          %p348 = pneg %p124
        $region54: #{tpu_custom_call.1} parent=43 // pred_check_branch
          %350 = sbr.rel (%p348) target = $region56
        $region55: #{tpu_custom_call.1} parent=43 // pred_region
          %351 = dma.done [#allocation8], 2048
        $region56: #{tpu_custom_call.1} parent=43 // pred_fallthru
          _
        // Predicated region
        $region57: #{tpu_custom_call.1} parent=43 // pred_check
          %p352 = pneg %p145
        $region58: #{tpu_custom_call.1} parent=43 // pred_check_branch
          %354 = sbr.rel (%p352) target = $region60
        $region59: #{tpu_custom_call.1} parent=43 // pred_region
          %355 = dma.done [#allocation11], 256
        $region60: #{tpu_custom_call.1} parent=43 // pred_fallthru
          _
        // Predicated region
        $region61: #{tpu_custom_call.1} parent=43 // pred_check
          %p356 = pneg %p166
        $region62: #{tpu_custom_call.1} parent=43 // pred_check_branch
          %358 = sbr.rel (%p356) target = $region64
        $region63: #{tpu_custom_call.1} parent=43 // pred_region
          %359 = dma.done [#allocation11], 1024
        $region64: #{tpu_custom_call.1} parent=43 // pred_fallthru
          _
        %s360 = sand.u32 %s54, 1
        %s361 = scalar_lea.sflag [#allocation5], %s360
        %s362 = sand.u32 %s54, 1
        %s363 = smul.addr %s362, 32
        %s364 = scalar_lea.vmem [#allocation4], %s363
        %p365 = pneg %p67
        %p366 = pneg %p64
        %s367 = sand.u32 %s32, 1
        %s368 = scalar_lea.sflag [#allocation8], %s367
        %s369 = sand.u32 %s90, 1
        %s370 = smul.addr %s369, 8
        %s371 = scalar_lea.vmem [#allocation7], %s370
        %p372 = pneg %p103
        %p373 = pneg %p100
        %p374 = pneg %p124
        %p375 = pneg %p121
        %p376 = pneg %p145
        %p377 = pneg %p142
        %p378 = pneg %p166
        %p379 = pneg %p163
        %p380 = pneg %p187
        %p381 = pneg %p184
        %p382 = pneg %p215
        %p383 = pneg %p212
        %s384 = sand.u32 %s202, 1
        %s385 = scalar_lea.sflag [#allocation6], %s384
        %s386 = sand.u32 %s202, 1
        %s387 = smul.addr %s386, 32
        %s388 = scalar_lea.vmem [#allocation13], %s387
        %s389 = smul.u32 4, %s37
        %s390 = smul.u32 %s37, 4
        %s391 = ssub.s32 %s390, 1
        %p392 = scmp.gt.s32.totalorder %s391, 0
        %s393 = scalar_select %p392, %s391, 0
        %s394 = smul.u32 4, %s37
        %v396 = vld [vmem:[%s334] sm:$0xff]
        %v397 = vld [vmem:[%s334 + $0x8] sm:$0xff]
        %v398 = vld [vmem:[%s334 + $0x10] sm:$0xff]
        %v399 = vld [vmem:[%s334 + $0x18] sm:$0xff]
        %v400 = vld [vmem:[%s343] sm:$0xff]
        %v401 = vld [vmem:[#allocation10] sm:$0xff]
        %v402 = vld [vmem:[#allocation10 + $0x8] sm:$0x1]
        %s403 = sld [smem:[#allocation3 + %s36]]
        %s404 = smul.u32 %s37, 32
        %v405 = vlaneseq
        %v406 = vshrl.u32 %v405, 7
        %v407 = vadd.s32 %v406, 8
        %v408 = vadd.s32 %v406, 16
        %v409 = vadd.s32 %v406, 24
        %v410 = vstv %s404
        %v411 = vadd.s32 %v406, %v410
        %v412 = vadd.s32 %v407, %v410
        %v413 = vadd.s32 %v408, %v410
        %v414 = vadd.s32 %v409, %v410
        %v415 = vstv %s403
        %vm416 = vcmp.lt.s32.totalorder %v411, %v415
        %vm417 = vcmp.lt.s32.totalorder %v412, %v415
        %vm418 = vcmp.lt.s32.totalorder %v413, %v415
        %vm419 = vcmp.lt.s32.totalorder %v414, %v415
        %v420 = vsel %vm416, 1, 0
        %v421 = vsel %vm417, 1, 0
        %v422 = vsel %vm418, 1, 0
        %v423 = vsel %vm419, 1, 0
        %v424 = vcvt.s32.f32 %v420
        %v425 = vcvt.s32.f32 %v421
        %v426 = vcvt.s32.f32 %v422
        %v427 = vcvt.s32.f32 %v423
        %s428 = ssub.s32 %s404, 8
        %v429 = vstv %s428
        %v430 = vadd.s32 %v406, %v429
        %vm431 = vcmp.ge.s32.totalorder %v430, 0
        %vm432 = vcmp.lt.s32.totalorder %v430, %v415
        %vm433 = vmand %vm431, %vm432
        %v434 = vsel %vm433, 1.0, 0.0
        %v435 = vld [vmem:[#allocation9] sm:$0xff]
        %v436 = vld [vmem:[#allocation9 + $0x8] sm:$0xff]
        %v437 = vld [vmem:[#allocation9 + $0x10] sm:$0xff]
        %v438 = vld [vmem:[#allocation9 + $0x18] sm:$0xff]
        %v439 = vld [vmem:[#allocation9 + $0x20] sm:$0xff]
        %v440 = vld [vmem:[#allocation9 + $0x28] sm:$0xff]
        %v441 = vld [vmem:[#allocation9 + $0x30] sm:$0xff]
        %v442 = vld [vmem:[#allocation9 + $0x38] sm:$0xff]
        %v443 = vld [vmem:[#allocation9 + $0x40] sm:$0xff]
        %v444 = vld [vmem:[#allocation9 + $0x48] sm:$0xff]
        %v445 = vld [vmem:[#allocation9 + $0x50] sm:$0xff]
        %v446 = vld [vmem:[#allocation9 + $0x58] sm:$0xff]
        %v447 = vld [vmem:[#allocation9 + $0x60] sm:$0xff]
        %v448 = vld [vmem:[#allocation9 + $0x68] sm:$0xff]
        %v449 = vld [vmem:[#allocation9 + $0x70] sm:$0xff]
        %v450 = vld [vmem:[#allocation9 + $0x78] sm:$0xff]
        %v451 = vld [vmem:[%s6] sm:$0x1]
        %v452 = vld [vmem:[%s6 + $0x1] sm:$0x1]
        %v453 = vld [vmem:[%s6 + $0x2] sm:$0x1]
        %v454 = vld [vmem:[%s6 + $0x3] sm:$0x1]
        %v455 = vpack.c.bf16 %v397, %v396
        %v456 = vpack.c.bf16 %v399, %v398
        %v473 = vunpack.c.l.b16 %v435
        %v474 = vunpack.c.h.b16 %v435
        %v475 = vunpack.c.l.b16 %v436
        %v476 = vunpack.c.h.b16 %v436
        %v477 = vunpack.c.l.b16 %v437
        %v478 = vunpack.c.h.b16 %v437
        %v479 = vunpack.c.l.b16 %v438
        %v480 = vunpack.c.h.b16 %v438
        %v481 = vunpack.c.l.b16 %v439
        %v482 = vunpack.c.h.b16 %v439
        %v483 = vunpack.c.l.b16 %v440
        %v484 = vunpack.c.h.b16 %v440
        %v485 = vunpack.c.l.b16 %v441
        %v486 = vunpack.c.h.b16 %v441
        %v487 = vunpack.c.l.b16 %v442
        %v488 = vunpack.c.h.b16 %v442
        %v489 = vunpack.c.l.b16 %v443
        %v490 = vunpack.c.h.b16 %v443
        %v491 = vunpack.c.l.b16 %v444
        %v492 = vunpack.c.h.b16 %v444
        %v493 = vunpack.c.l.b16 %v445
        %v494 = vunpack.c.h.b16 %v445
        %v495 = vunpack.c.l.b16 %v446
        %v496 = vunpack.c.h.b16 %v446
        %v497 = vunpack.c.l.b16 %v447
        %v498 = vunpack.c.h.b16 %v447
        %v499 = vunpack.c.l.b16 %v448
        %v500 = vunpack.c.h.b16 %v448
        %v501 = vunpack.c.l.b16 %v449
        %v502 = vunpack.c.h.b16 %v449
        %v503 = vunpack.c.l.b16 %v450
        %v504 = vunpack.c.h.b16 %v450
        %v505 = vpack.c.b16 %v475, %v473
        %v506 = vpack.c.b16 %v476, %v474
        %v507 = vpack.c.b16 %v479, %v477
        %v508 = vpack.c.b16 %v480, %v478
        %v509 = vpack.c.b16 %v483, %v481
        %v510 = vpack.c.b16 %v484, %v482
        %v511 = vpack.c.b16 %v487, %v485
        %v512 = vpack.c.b16 %v488, %v486
        %v513 = vpack.c.b16 %v491, %v489
        %v514 = vpack.c.b16 %v492, %v490
        %v515 = vpack.c.b16 %v495, %v493
        %v516 = vpack.c.b16 %v496, %v494
        %v517 = vpack.c.b16 %v499, %v497
        %v518 = vpack.c.b16 %v500, %v498
        %v519 = vpack.c.b16 %v503, %v501
        %v520 = vpack.c.b16 %v504, %v502
        %537 = vmatprep.subr.bf16.mxu0 %v506
        %538 = vmatpush1.bf16.msra.mxu0 %v505
        %539 = vmatprep.subr.bf16.mxu0 %v508
        %540 = vmatpush1.bf16.msra.mxu0 %v507
        %541 = vmatprep.subr.bf16.mxu0 %v510
        %542 = vmatpush1.bf16.msra.mxu0 %v509
        %543 = vmatprep.subr.bf16.mxu0 %v512
        %544 = vmatpush1.bf16.msra.mxu0 %v511
        %545 = vmatprep.subr.bf16.mxu0 %v514
        %546 = vmatpush1.bf16.msra.mxu0 %v513
        %547 = vmatprep.subr.bf16.mxu0 %v516
        %548 = vmatpush1.bf16.msra.mxu0 %v515
        %549 = vmatprep.subr.bf16.mxu0 %v518
        %550 = vmatpush1.bf16.msra.mxu0 %v517
        %551 = vmatprep.subr.bf16.mxu0 %v520
        %552 = vmatpush1.bf16.msra.mxu0 %v519
        %553 = vmatprep.subr.bf16.mxu0 0
        %554 = vmatpush1.bf16.msra.mxu0 0
        %555 = vmatprep.subr.bf16.mxu0 0
        %556 = vmatpush1.bf16.msra.mxu0 0
        %557 = vmatprep.subr.bf16.mxu0 0
        %558 = vmatpush1.bf16.msra.mxu0 0
        %559 = vmatprep.subr.bf16.mxu0 0
        %560 = vmatpush1.bf16.msra.mxu0 0
        %561 = vmatprep.subr.bf16.mxu0 0
        %562 = vmatpush1.bf16.msra.mxu0 0
        %563 = vmatprep.subr.bf16.mxu0 0
        %564 = vmatpush1.bf16.msra.mxu0 0
        %565 = vmatprep.subr.bf16.mxu0 0
        %566 = vmatpush1.bf16.msra.mxu0 0
        %567 = vmatprep.subr.bf16.mxu0 0
        %568 = vmatpush1.bf16.msra.mxu0 0
        %569 = vmatprep.mubr.bf16.mxu0 0
        %570 = vmatmul.mubr.bf16.gmra.mrb[0].mxu0 %v455
        %v571 = vpop.f32.mrb[0].mxu0
        %v572 = vadd.f32 0.0, %v571
        %v573 = vpop.f32.mrb[0].mxu0
        %v574 = vadd.f32 0.0, %v573
        %v575 = vpop.f32.mrb[0].mxu0
        %v576 = vadd.f32 0.0, %v575
        %v577 = vpop.f32.mrb[0].mxu0
        %v578 = vadd.f32 0.0, %v577
        %579 = vmatprep.mubr.bf16.mxu0 0
        %580 = vmatmul.mubr.bf16.gmra.mrb[0].mxu0 %v456
        %v581 = vpop.f32.mrb[0].mxu0
        %v582 = vadd.f32 0.0, %v581
        %v583 = vpop.f32.mrb[0].mxu0
        %v584 = vadd.f32 0.0, %v583
        %v585 = vpop.f32.mrb[0].mxu0
        %v586 = vadd.f32 0.0, %v585
        %v587 = vpop.f32.mrb[0].mxu0
        %v588 = vadd.f32 0.0, %v587
        %589 = vdwg.mxu0
        %v590 = vlaneseq
        %v591 = vshrl.u32 %v590, 7
        %v592 = vsub.s32 0, %v591
        %v593 = vrot.slane %v451, %v592
        %v594 = vadd.f32 %v572, %v593
        %v595 = vadd.f32 %v576, %v593
        %v596 = vadd.f32 %v582, %v593
        %v597 = vadd.f32 %v586, %v593
        %v598 = vlaneseq
        %v599 = vshrl.u32 %v598, 7
        %v600 = vsub.s32 0, %v599
        %v601 = vrot.slane %v452, %v600
        %v602 = vadd.f32 %v574, %v601
        %v603 = vadd.f32 %v578, %v601
        %v604 = vadd.f32 %v584, %v601
        %v605 = vadd.f32 %v588, %v601
        %v606 = vxor.u32 %v602, 2147483648
        %v607 = vxor.u32 %v603, 2147483648
        %v608 = vxor.u32 %v604, 2147483648
        %v609 = vxor.u32 %v605, 2147483648
        %v610 = vmul.f32 %v606, 1.442695
        %v611 = vpow.pop %v610
        %v612 = vmul.f32 %v607, 1.442695
        %v613 = vpow.pop %v612
        %v614 = vmul.f32 %v608, 1.442695
        %v615 = vpow.pop %v614
        %v616 = vmul.f32 %v609, 1.442695
        %v617 = vpow.pop %v616
        %v618 = vadd.f32 %v611, 1.0
        %v619 = vadd.f32 %v613, 1.0
        %v620 = vadd.f32 %v615, 1.0
        %v621 = vadd.f32 %v617, 1.0
        %v622 = vrcp.pop %v618
        %v623 = vmul.f32 1.0, %v622
        %v624 = vrcp.pop %v619
        %v625 = vmul.f32 1.0, %v624
        %v626 = vrcp.pop %v620
        %v627 = vmul.f32 1.0, %v626
        %v628 = vrcp.pop %v621
        %v629 = vmul.f32 1.0, %v628
        %v630 = vmul.f32 %v594, %v623
        %v631 = vmul.f32 %v595, %v625
        %v632 = vmul.f32 %v596, %v627
        %v633 = vmul.f32 %v597, %v629
        %v634 = vmul.f32 %v630, %v424
        %v635 = vmul.f32 %v631, %v425
        %v636 = vmul.f32 %v632, %v426
        %v637 = vmul.f32 %v633, %v427
        %v638 = vpack.c.bf16 %v400, %v400
        %639 = vmatprep.subr.bf16.mxu0 %v506
        %640 = vmatpush1.bf16.msra.mxu0 %v505
        %641 = vmatprep.subr.bf16.mxu0 %v508
        %642 = vmatpush1.bf16.msra.mxu0 %v507
        %643 = vmatprep.subr.bf16.mxu0 %v510
        %644 = vmatpush1.bf16.msra.mxu0 %v509
        %645 = vmatprep.subr.bf16.mxu0 %v512
        %646 = vmatpush1.bf16.msra.mxu0 %v511
        %647 = vmatprep.subr.bf16.mxu0 %v514
        %648 = vmatpush1.bf16.msra.mxu0 %v513
        %649 = vmatprep.subr.bf16.mxu0 %v516
        %650 = vmatpush1.bf16.msra.mxu0 %v515
        %651 = vmatprep.subr.bf16.mxu0 %v518
        %652 = vmatpush1.bf16.msra.mxu0 %v517
        %653 = vmatprep.subr.bf16.mxu0 %v520
        %654 = vmatpush1.bf16.msra.mxu0 %v519
        %655 = vmatprep.subr.bf16.mxu0 0
        %656 = vmatpush1.bf16.msra.mxu0 0
        %657 = vmatprep.subr.bf16.mxu0 0
        %658 = vmatpush1.bf16.msra.mxu0 0
        %659 = vmatprep.subr.bf16.mxu0 0
        %660 = vmatpush1.bf16.msra.mxu0 0
        %661 = vmatprep.subr.bf16.mxu0 0
        %662 = vmatpush1.bf16.msra.mxu0 0
        %663 = vmatprep.subr.bf16.mxu0 0
        %664 = vmatpush1.bf16.msra.mxu0 0
        %665 = vmatprep.subr.bf16.mxu0 0
        %666 = vmatpush1.bf16.msra.mxu0 0
        %667 = vmatprep.subr.bf16.mxu0 0
        %668 = vmatpush1.bf16.msra.mxu0 0
        %669 = vmatprep.subr.bf16.mxu0 0
        %670 = vmatpush1.bf16.msra.mxu0 0
        %671 = vmatprep.mubr.bf16.mxu0 0
        %672 = vmatmul.mubr.bf16.gmra.mrb[0].mxu0 %v638
        %v673 = vpop.f32.mrb[0].mxu0
        %v674 = vadd.f32 0.0, %v673
        %v675 = vpop.f32.mrb[0].mxu0
        %v676 = vadd.f32 0.0, %v675
        %v677 = vpop.f32.mrb[0].mxu0
        %v678 = vpop.f32.mrb[0].mxu0
        %679 = vdwg.mxu0
        %v680 = vadd.f32 %v674, %v593
        %v681 = vadd.f32 %v676, %v601
        %v682 = vxor.u32 %v681, 2147483648
        %v683 = vmul.f32 %v682, 1.442695
        %v684 = vpow.pop %v683
        %v685 = vadd.f32 %v684, 1.0
        %v686 = vrcp.pop %v685
        %v687 = vmul.f32 1.0, %v686
        %v688 = vmul.f32 %v680, %v687
        %v689 = vmul.f32 %v688, %v434
        %v690 = vlaneseq
        %v691 = vshrl.u32 %v690, 7
        %v692 = vsub.s32 0, %v691
        %v693 = vrot.slane %v401, %v692
        %v694 = vmul.f32 %v689, %v693
        %v695 = vmul.f32 %v634, %v693
        %v696 = vmul.f32 %v635, %v693
        %v697 = vmul.f32 %v636, %v693
        %v698 = vlaneseq
        %v699 = vshrl.u32 %v698, 7
        %v700 = vsub.s32 1, %v699
        %v701 = vrot.slane %v401, %v700
        %v702 = vmul.f32 %v689, %v701
        %v703 = vmul.f32 %v634, %v701
        %v704 = vmul.f32 %v635, %v701
        %v705 = vmul.f32 %v636, %v701
        %v706 = vmul.f32 %v637, %v701
        %vm712 = vcmask 1046528
        %v713 = vrot.slane %v702, 1
        %v714 = vrot.slane %v703, 1
        %v715 = vsel %vm712, %v713, %v714
        %v716 = vrot.slane %v704, 1
        %v717 = vsel %vm712, %v714, %v716
        %v718 = vrot.slane %v705, 1
        %v719 = vsel %vm712, %v716, %v718
        %v720 = vrot.slane %v706, 1
        %v721 = vsel %vm712, %v718, %v720
        %v726 = vadd.f32 %v694, %v715
        %v727 = vadd.f32 %v695, %v717
        %v728 = vadd.f32 %v696, %v719
        %v729 = vadd.f32 %v697, %v721
        %v730 = vlaneseq
        %v731 = vshrl.u32 %v730, 7
        %v732 = vsub.s32 2, %v731
        %v733 = vrot.slane %v401, %v732
        %v734 = vmul.f32 %v689, %v733
        %v735 = vmul.f32 %v634, %v733
        %v736 = vmul.f32 %v635, %v733
        %v737 = vmul.f32 %v636, %v733
        %v738 = vmul.f32 %v637, %v733
        %vm744 = vcmask 1045504
        %v745 = vrot.slane %v734, 2
        %v746 = vrot.slane %v735, 2
        %v747 = vsel %vm744, %v745, %v746
        %v748 = vrot.slane %v736, 2
        %v749 = vsel %vm744, %v746, %v748
        %v750 = vrot.slane %v737, 2
        %v751 = vsel %vm744, %v748, %v750
        %v752 = vrot.slane %v738, 2
        %v753 = vsel %vm744, %v750, %v752
        %v758 = vadd.f32 %v726, %v747
        %v759 = vadd.f32 %v727, %v749
        %v760 = vadd.f32 %v728, %v751
        %v761 = vadd.f32 %v729, %v753
        %v762 = vlaneseq
        %v763 = vshrl.u32 %v762, 7
        %v764 = vsub.s32 3, %v763
        %v765 = vrot.slane %v401, %v764
        %v766 = vmul.f32 %v689, %v765
        %v767 = vmul.f32 %v634, %v765
        %v768 = vmul.f32 %v635, %v765
        %v769 = vmul.f32 %v636, %v765
        %v770 = vmul.f32 %v637, %v765
        %vm776 = vcmask 1044480
        %v777 = vrot.slane %v766, 3
        %v778 = vrot.slane %v767, 3
        %v779 = vsel %vm776, %v777, %v778
        %v780 = vrot.slane %v768, 3
        %v781 = vsel %vm776, %v778, %v780
        %v782 = vrot.slane %v769, 3
        %v783 = vsel %vm776, %v780, %v782
        %v784 = vrot.slane %v770, 3
        %v785 = vsel %vm776, %v782, %v784
        %v790 = vadd.f32 %v758, %v779
        %v791 = vadd.f32 %v759, %v781
        %v792 = vadd.f32 %v760, %v783
        %v793 = vadd.f32 %v761, %v785
        %v794 = vlaneseq
        %v795 = vshrl.u32 %v794, 7
        %v796 = vsub.s32 4, %v795
        %v797 = vrot.slane %v401, %v796
        %v798 = vmul.f32 %v689, %v797
        %v799 = vmul.f32 %v634, %v797
        %v800 = vmul.f32 %v635, %v797
        %v801 = vmul.f32 %v636, %v797
        %v802 = vmul.f32 %v637, %v797
        %vm808 = vcmask 1043456
        %v809 = vrot.slane %v798, 4
        %v810 = vrot.slane %v799, 4
        %v811 = vsel %vm808, %v809, %v810
        %v812 = vrot.slane %v800, 4
        %v813 = vsel %vm808, %v810, %v812
        %v814 = vrot.slane %v801, 4
        %v815 = vsel %vm808, %v812, %v814
        %v816 = vrot.slane %v802, 4
        %v817 = vsel %vm808, %v814, %v816
        %v822 = vadd.f32 %v790, %v811
        %v823 = vadd.f32 %v791, %v813
        %v824 = vadd.f32 %v792, %v815
        %v825 = vadd.f32 %v793, %v817
        %v826 = vlaneseq
        %v827 = vshrl.u32 %v826, 7
        %v828 = vsub.s32 5, %v827
        %v829 = vrot.slane %v401, %v828
        %v830 = vmul.f32 %v689, %v829
        %v831 = vmul.f32 %v634, %v829
        %v832 = vmul.f32 %v635, %v829
        %v833 = vmul.f32 %v636, %v829
        %v834 = vmul.f32 %v637, %v829
        %vm840 = vcmask 1042432
        %v841 = vrot.slane %v830, 5
        %v842 = vrot.slane %v831, 5
        %v843 = vsel %vm840, %v841, %v842
        %v844 = vrot.slane %v832, 5
        %v845 = vsel %vm840, %v842, %v844
        %v846 = vrot.slane %v833, 5
        %v847 = vsel %vm840, %v844, %v846
        %v848 = vrot.slane %v834, 5
        %v849 = vsel %vm840, %v846, %v848
        %v854 = vadd.f32 %v822, %v843
        %v855 = vadd.f32 %v823, %v845
        %v856 = vadd.f32 %v824, %v847
        %v857 = vadd.f32 %v825, %v849
        %v858 = vlaneseq
        %v859 = vshrl.u32 %v858, 7
        %v860 = vsub.s32 6, %v859
        %v861 = vrot.slane %v401, %v860
        %v862 = vmul.f32 %v689, %v861
        %v863 = vmul.f32 %v634, %v861
        %v864 = vmul.f32 %v635, %v861
        %v865 = vmul.f32 %v636, %v861
        %v866 = vmul.f32 %v637, %v861
        %vm872 = vcmask 1041408
        %v873 = vrot.slane %v862, 6
        %v874 = vrot.slane %v863, 6
        %v875 = vsel %vm872, %v873, %v874
        %v876 = vrot.slane %v864, 6
        %v877 = vsel %vm872, %v874, %v876
        %v878 = vrot.slane %v865, 6
        %v879 = vsel %vm872, %v876, %v878
        %v880 = vrot.slane %v866, 6
        %v881 = vsel %vm872, %v878, %v880
        %v886 = vadd.f32 %v854, %v875
        %v887 = vadd.f32 %v855, %v877
        %v888 = vadd.f32 %v856, %v879
        %v889 = vadd.f32 %v857, %v881
        %v890 = vlaneseq
        %v891 = vshrl.u32 %v890, 7
        %v892 = vsub.s32 7, %v891
        %v893 = vrot.slane %v401, %v892
        %v894 = vmul.f32 %v689, %v893
        %v895 = vmul.f32 %v634, %v893
        %v896 = vmul.f32 %v635, %v893
        %v897 = vmul.f32 %v636, %v893
        %v898 = vmul.f32 %v637, %v893
        %vm904 = vcmask 1040384
        %v905 = vrot.slane %v894, 7
        %v906 = vrot.slane %v895, 7
        %v907 = vsel %vm904, %v905, %v906
        %v908 = vrot.slane %v896, 7
        %v909 = vsel %vm904, %v906, %v908
        %v910 = vrot.slane %v897, 7
        %v911 = vsel %vm904, %v908, %v910
        %v912 = vrot.slane %v898, 7
        %v913 = vsel %vm904, %v910, %v912
        %v918 = vadd.f32 %v886, %v907
        %v919 = vadd.f32 %v887, %v909
        %v920 = vadd.f32 %v888, %v911
        %v921 = vadd.f32 %v889, %v913
        %v922 = vlaneseq
        %v923 = vshrl.u32 %v922, 7
        %v924 = vsub.s32 0, %v923
        %v925 = vrot.slane %v402, %v924
        %v926 = vmul.f32 %v634, %v925
        %v927 = vmul.f32 %v635, %v925
        %v928 = vmul.f32 %v636, %v925
        %v929 = vmul.f32 %v637, %v925
        %v930 = vadd.f32 %v918, %v926
        %v931 = vadd.f32 %v919, %v927
        %v932 = vadd.f32 %v920, %v928
        %v933 = vadd.f32 %v921, %v929
        %v934 = vlaneseq
        %v935 = vshrl.u32 %v934, 7
        %v936 = vsub.s32 0, %v935
        %v937 = vrot.slane %v453, %v936
        %v938 = vadd.f32 %v930, %v937
        %v939 = vadd.f32 %v931, %v937
        %v940 = vadd.f32 %v932, %v937
        %v941 = vadd.f32 %v933, %v937
        %v942 = vxor.u32 %v938, 2147483648
        %v943 = vxor.u32 %v939, 2147483648
        %v944 = vxor.u32 %v940, 2147483648
        %v945 = vxor.u32 %v941, 2147483648
        %v946 = vmul.f32 %v942, 1.442695
        %v947 = vpow.pop %v946
        %v948 = vmul.f32 %v943, 1.442695
        %v949 = vpow.pop %v948
        %v950 = vmul.f32 %v944, 1.442695
        %v951 = vpow.pop %v950
        %v952 = vmul.f32 %v945, 1.442695
        %v953 = vpow.pop %v952
        %v954 = vadd.f32 %v947, 1.0
        %v955 = vadd.f32 %v949, 1.0
        %v956 = vadd.f32 %v951, 1.0
        %v957 = vadd.f32 %v953, 1.0
        %v958 = vrcp.pop %v954
        %v959 = vmul.f32 1.0, %v958
        %v960 = vrcp.pop %v955
        %v961 = vmul.f32 1.0, %v960
        %v962 = vrcp.pop %v956
        %v963 = vmul.f32 1.0, %v962
        %v964 = vrcp.pop %v957
        %v965 = vmul.f32 1.0, %v964
        %v966 = vmul.f32 %v938, %v959
        %v967 = vmul.f32 %v939, %v961
        %v968 = vmul.f32 %v940, %v963
        %v969 = vmul.f32 %v941, %v965
        %v970 = vpack.c.bf16 %v967, %v966
        %v971 = vpack.c.bf16 %v969, %v968
        %v972 = vld [vmem:[#allocation12] sm:$0xf]
        %v973 = vld [vmem:[#allocation12 + $0x4] sm:$0xf]
        %v974 = vld [vmem:[#allocation12 + $0x8] sm:$0xf]
        %v975 = vld [vmem:[#allocation12 + $0xc] sm:$0xf]
        %v976 = vld [vmem:[#allocation12 + $0x10] sm:$0xf]
        %v977 = vld [vmem:[#allocation12 + $0x14] sm:$0xf]
        %v978 = vld [vmem:[#allocation12 + $0x18] sm:$0xf]
        %v979 = vld [vmem:[#allocation12 + $0x1c] sm:$0xf]
        %v980 = vld [vmem:[#allocation12 + $0x20] sm:$0xf]
        %v981 = vld [vmem:[#allocation12 + $0x24] sm:$0xf]
        %v982 = vld [vmem:[#allocation12 + $0x28] sm:$0xf]
        %v983 = vld [vmem:[#allocation12 + $0x2c] sm:$0xf]
        %v984 = vld [vmem:[#allocation12 + $0x30] sm:$0xf]
        %v985 = vld [vmem:[#allocation12 + $0x34] sm:$0xf]
        %v986 = vld [vmem:[#allocation12 + $0x38] sm:$0xf]
        %v987 = vld [vmem:[#allocation12 + $0x3c] sm:$0xf]
        %v988 = vlaneseq
        %v989 = vshrl.u32 %v988, 7
        %v990 = vsub.s32 0, %v989
        %v991 = vrot.slane %v454, %v990
        %v1008 = vunpack.c.l.b16 %v972
        %v1009 = vunpack.c.l.b16 %v973
        %v1010 = vunpack.c.l.b16 %v974
        %v1011 = vunpack.c.l.b16 %v975
        %v1012 = vunpack.c.l.b16 %v976
        %v1013 = vunpack.c.l.b16 %v977
        %v1014 = vunpack.c.l.b16 %v978
        %v1015 = vunpack.c.l.b16 %v979
        %v1016 = vunpack.c.l.b16 %v980
        %v1017 = vunpack.c.l.b16 %v981
        %v1018 = vunpack.c.l.b16 %v982
        %v1019 = vunpack.c.l.b16 %v983
        %v1020 = vunpack.c.l.b16 %v984
        %v1021 = vunpack.c.l.b16 %v985
        %v1022 = vunpack.c.l.b16 %v986
        %v1023 = vunpack.c.l.b16 %v987
        %v1024 = vpack.c.b16 %v1009, %v1008
        %v1025 = vpack.c.b16 %v1011, %v1010
        %v1026 = vpack.c.b16 %v1013, %v1012
        %v1027 = vpack.c.b16 %v1015, %v1014
        %v1028 = vpack.c.b16 %v1017, %v1016
        %v1029 = vpack.c.b16 %v1019, %v1018
        %v1030 = vpack.c.b16 %v1021, %v1020
        %v1031 = vpack.c.b16 %v1023, %v1022
        %1040 = vmatprep.subr.bf16.mxu0 0
        %1041 = vmatpush1.bf16.msra.mxu0 %v1024
        %1042 = vmatprep.subr.bf16.mxu0 0
        %1043 = vmatpush1.bf16.msra.mxu0 %v1025
        %1044 = vmatprep.subr.bf16.mxu0 0
        %1045 = vmatpush1.bf16.msra.mxu0 %v1026
        %1046 = vmatprep.subr.bf16.mxu0 0
        %1047 = vmatpush1.bf16.msra.mxu0 %v1027
        %1048 = vmatprep.subr.bf16.mxu0 0
        %1049 = vmatpush1.bf16.msra.mxu0 %v1028
        %1050 = vmatprep.subr.bf16.mxu0 0
        %1051 = vmatpush1.bf16.msra.mxu0 %v1029
        %1052 = vmatprep.subr.bf16.mxu0 0
        %1053 = vmatpush1.bf16.msra.mxu0 %v1030
        %1054 = vmatprep.subr.bf16.mxu0 0
        %1055 = vmatpush1.bf16.msra.mxu0 %v1031
        %1056 = vmatprep.subr.bf16.mxu0 0
        %1057 = vmatpush1.bf16.msra.mxu0 0
        %1058 = vmatprep.subr.bf16.mxu0 0
        %1059 = vmatpush1.bf16.msra.mxu0 0
        %1060 = vmatprep.subr.bf16.mxu0 0
        %1061 = vmatpush1.bf16.msra.mxu0 0
        %1062 = vmatprep.subr.bf16.mxu0 0
        %1063 = vmatpush1.bf16.msra.mxu0 0
        %1064 = vmatprep.subr.bf16.mxu0 0
        %1065 = vmatpush1.bf16.msra.mxu0 0
        %1066 = vmatprep.subr.bf16.mxu0 0
        %1067 = vmatpush1.bf16.msra.mxu0 0
        %1068 = vmatprep.subr.bf16.mxu0 0
        %1069 = vmatpush1.bf16.msra.mxu0 0
        %1070 = vmatprep.subr.bf16.mxu0 0
        %1071 = vmatpush1.bf16.msra.mxu0 0
        %1072 = vmatprep.mubr.bf16.mxu0 0
        %1073 = vmatmul.mubr.bf16.gmra.mrb[0].mxu0 %v970
        %v1074 = vpop.f32.mrb[0].mxu0
        %v1075 = vadd.f32 %v991, %v1074
        %v1076 = vpop.f32.mrb[0].mxu0
        %v1077 = vpop.f32.mrb[0].mxu0
        %v1078 = vadd.f32 %v991, %v1077
        %v1079 = vpop.f32.mrb[0].mxu0
        %1080 = vmatprep.mubr.bf16.mxu0 0
        %1081 = vmatmul.mubr.bf16.gmra.mrb[0].mxu0 %v971
        %v1082 = vpop.f32.mrb[0].mxu0
        %v1083 = vadd.f32 %v991, %v1082
        %v1084 = vpop.f32.mrb[0].mxu0
        %v1085 = vpop.f32.mrb[0].mxu0
        %v1086 = vadd.f32 %v991, %v1085
        %v1087 = vpop.f32.mrb[0].mxu0
        %1088 = vdwg.mxu0
        %1089 = vst [vmem:[%s388] sm:$0xff] %v1075
        %1090 = vst [vmem:[%s388 + $0x8] sm:$0xff] %v1078
        %1091 = vst [vmem:[%s388 + $0x10] sm:$0xff] %v1083
        %1092 = vst [vmem:[%s388 + $0x18] sm:$0xff] %v1086
        %s1093 = sand.u32 %s202, 1
        %s1094 = scalar_lea.sflag [#allocation6], %s1093
        %s1095 = sand.u32 %s202, 1
        %s1096 = smul.addr %s1095, 32
        %s1097 = scalar_lea.vmem [#allocation13], %s1096
        // Predicated region
        $region65: #{tpu_custom_call.1} parent=43 // pred_check
          %p1098 = pneg %p212
        $region66: #{tpu_custom_call.1} parent=43 // pred_check_branch
          %1100 = sbr.rel (%p1098) target = $region68
        $region67: #{tpu_custom_call.1} parent=43 // pred_region
          %s1101 = smul.u32 4, %s37
          %s1103 = ssub.s32 512, 512
          %1104 = vsyncadd %s1094, %s1103
          %s1105 = smul.addr %s36, 8
          %s1106 = sadd.s32 %s1101, %s1105
          %s1107 = smul.addr %s1106, 128
          %s1108 = scalar_lea.hbm %s7, %s1107
          %s1109 = sshll.u32 %s1097, 4
          %s1110 = int_to_ptr.vmem [resolvable:$true] %s1109
          %1115 = dma.vmem_to_hbm [thread:$0]  %s1110, 512, %s1108, %s1094, 128, 128, 8
        $region68: #{tpu_custom_call.1} parent=43 // pred_fallthru
          _
      $region44: #{tpu_custom_call.1} parent=5 // pred_fallthru
        _
      %p1116 = scmp.le.s32.totalorder 2, %s27
      // Predicated region
      $region69: #{tpu_custom_call.1} parent=5 // pred_check
        %p1117 = pneg %p1116
      $region70: #{tpu_custom_call.1} parent=5 // pred_check_branch
        %1119 = sbr.rel (%p1117) target = $region72
      $region71: #{tpu_custom_call.1} parent=5 // pred_region
        %s1120 = ssub.s32 %s27, 2
        // Predicated region
        $region73: #{tpu_custom_call.1} parent=71 // pred_check
          %p1121 = pneg %p218
        $region74: #{tpu_custom_call.1} parent=71 // pred_check_branch
          %1123 = sbr.rel (%p1121) target = $region76
        $region75: #{tpu_custom_call.1} parent=71 // pred_region
          %s1124 = sand.u32 %s203, 1
          %s1125 = scalar_lea.sflag [#allocation6], %s1124
          %s1126 = sand.u32 %s203, 1
          %s1127 = smul.addr %s1126, 32
          %s1128 = scalar_lea.vmem [#allocation13], %s1127
          %1129 = dma.done %s1125, 512
        $region76: #{tpu_custom_call.1} parent=71 // pred_fallthru
          _
      $region72: #{tpu_custom_call.1} parent=5 // pred_fallthru
        _
    $region6: #{tpu_custom_call.1} parent=1 // loop_footer
      %s31 = sadd.s32 1, %s27
    $region7: #{tpu_custom_call.1} parent=1 // loop_footer_branch
      %26 = sbr.rel target = $region3
    $region8: #{tpu_custom_call.1} parent=1 // loop_exit
      _
    %1130 = vsyncpa [#allocation5], 1
    %s1131 = scalar_lea.sflag [#allocation5], 1
    %1132 = vsyncpa %s1131, 1
    %1133 = vsyncpa [#allocation8], 1
    %s1134 = scalar_lea.sflag [#allocation8], 1
    %1135 = vsyncpa %s1134, 1
    %1136 = vsyncpa [#allocation11], 1
    %1137 = vsyncpa [#allocation6], 1
    %s1138 = scalar_lea.sflag [#allocation6], 1
    %1139 = vsyncpa %s1138, 1

</llo_original>
